<compile_context>
chip_gen: v5e
topology: v5e:2x2
jax: 0.10.0
libtpu: 0.0.40
codegen_flags: <defaults>
</compile_context>

<pallas_src>
import jax
import jax.numpy as jnp
from jax.experimental import pallas as pl
from jax.experimental.pallas import tpu as pltpu


def _round_up(a, b):
    return (a + b - 1) // b * b


def _pick_tile(dim, candidates):
    return next(t for t in candidates if dim % t == 0)


# ---------------------------------------------------------------------------
# Pre-projection kernel: proj = X_pad @ [Wl1^T | Wr1^T]   -> (N_pad, 2*H_pad) f32
# ---------------------------------------------------------------------------
def _proj_kernel(x_ref, w_ref, o_ref, acc_ref):
    k = pl.program_id(1)

    @pl.when(k == 0)
    def _():
        acc_ref[...] = jnp.zeros_like(acc_ref)

    acc_ref[...] += jnp.dot(x_ref[...], w_ref[...],
                            preferred_element_type=jnp.float32)

    @pl.when(k == pl.num_programs(1) - 1)
    def _():
        o_ref[...] = acc_ref[...]


def _preproject(x_pad, w1cat):
    n_pad, f_pad = x_pad.shape
    out_w = w1cat.shape[1]
    tm = _pick_tile(n_pad, (256, 128))
    tk = _pick_tile(f_pad, (512, 256, 128))
    return pl.pallas_call(
        _proj_kernel,
        out_shape=jax.ShapeDtypeStruct((n_pad, out_w), jnp.float32),
        grid_spec=pltpu.PrefetchScalarGridSpec(
            num_scalar_prefetch=0,
            grid=(n_pad // tm, f_pad // tk),
            in_specs=[
                pl.BlockSpec((tm, tk), lambda i, k: (i, k)),
                pl.BlockSpec((tk, out_w), lambda i, k: (k, 0)),
            ],
            out_specs=pl.BlockSpec((tm, out_w), lambda i, k: (i, 0)),
            scratch_shapes=[pltpu.VMEM((tm, out_w), jnp.float32)],
        ),
        compiler_params=pltpu.CompilerParams(
            dimension_semantics=("parallel", "arbitrary")),
    )(x_pad, w1cat)


# ---------------------------------------------------------------------------
# Fused two-layer SAGE kernel (streams the adjacency, h resident in VMEM).
# ---------------------------------------------------------------------------
def _make_sage_kernel(tm, tk, num_classes):
    def kernel(a_ref, dinv_ref, xwl_ref, xwr_ref, b1_ref, wl2_ref, wr2_ref,
               b2_ref, out_ref, h_ref, acc_ref):
        p = pl.program_id(0)      # 0 = layer 1, 1 = layer 2
        i = pl.program_id(1)      # row tile (output nodes)
        k = pl.program_id(2)      # column tile of A (neighbor reduction)
        nk = pl.num_programs(2)

        row0 = pl.multiple_of(i * tm, tm)
        col0 = pl.multiple_of(k * tk, tk)

        @pl.when(k == 0)
        def _():
            acc_ref[...] = jnp.zeros_like(acc_ref)

        # int8 0/1 adjacency tile -> bf16 MXU operand.  The i8->f32->bf16 casts
        # are cheap VPU work hidden under the (dominant) A DMA.
        a_bf = a_ref[...].astype(jnp.float32).astype(jnp.bfloat16)

        # ---- streamed aggregation: bf16 x bf16, f32 accumulation -----------
        @pl.when(p == 0)
        def _layer1_stream():
            xk = xwl_ref[pl.ds(col0, tk), :]                 # (tk, H_pad) bf16
            acc_ref[...] += jnp.dot(a_bf, xk,
                                    preferred_element_type=jnp.float32)

        @pl.when(p == 1)
        def _layer2_stream():
            hk = h_ref[pl.ds(col0, tk), :]                   # (tk, H_pad) bf16
            acc_ref[...] += jnp.dot(a_bf, hk,
                                    preferred_element_type=jnp.float32)

        # ---- layer-1 finalize: h = relu(mean_agg@Wl1^T + x@Wr1^T + b1) -----
        # (both projections were done by the pre-projection kernel)
        @pl.when((p == 0) & (k == nk - 1))
        def _finish1():
            agg = dinv_ref[...] * acc_ref[...]               # exact mean, hidden space
            z = agg + xwr_ref[...] + b1_ref[...]
            # dropout p=0 -> identity
            h_ref[pl.ds(row0, tm), :] = jnp.maximum(z, 0.0).astype(jnp.bfloat16)

        # ---- layer-2 finalize: two dots + bias, masked log_softmax ---------
        @pl.when((p == 1) & (k == nk - 1))
        def _finish2():
            agg = dinv_ref[...] * acc_ref[...]               # (tm, H_pad) f32
            hi = h_ref[pl.ds(row0, tm), :].astype(jnp.float32)
            z = (jnp.dot(agg, wl2_ref[...], preferred_element_type=jnp.float32)
                 + jnp.dot(hi, wr2_ref[...], preferred_element_type=jnp.float32)
                 + b2_ref[...])
            # Mask padded class lanes so they cannot corrupt the normalizer.
            lane = jax.lax.broadcasted_iota(jnp.int32, z.shape, 1)
            z = jnp.where(lane < num_classes, z, -1e30)
            m = jnp.max(z, axis=1, keepdims=True)
            lse = jnp.log(jnp.sum(jnp.exp(z - m), axis=1, keepdims=True)) + m
            out_ref[...] = z - lse                           # lane-dense store

    return kernel


def sage_forward(x, edge_index, params):
    """x: [N, F] float32 node features; edge_index: [2, E] int32 (src, dst)."""
    n, f = x.shape
    h = params["wl1"].shape[0]
    c = params["wl2"].shape[0]

    f_pad = _round_up(f, 128)
    h_pad = _round_up(h, 128)
    c_pad = _round_up(c, 128)
    n_pad = _round_up(n, 128)
    tm = tk = _pick_tile(n_pad, (512, 256, 128))
    ni = n_pad // tm
    nk = n_pad // tk

    # --- plain-JAX glue: adjacency + exact 1/deg + padded weights -----------
    src = edge_index[0].astype(jnp.int32)
    dst = edge_index[1].astype(jnp.int32)
    adj = jnp.zeros((n_pad, n_pad), jnp.float32).at[dst, src].add(1.0)
    deg = jnp.sum(adj, axis=1, keepdims=True)
    deg_inv = jnp.where(deg > 0, 1.0 / deg, 0.0).astype(jnp.float32)  # isolated -> 0
    # 0/1 edge counts stored int8 (exact up to 127 parallel edges per pair).
    adj_i8 = adj.astype(jnp.int8)

    x_pad = jnp.zeros((n_pad, f_pad), jnp.float32).at[:n, :f].set(
        x.astype(jnp.float32))

    def pad2(w, r, cc):
        return jnp.zeros((r, cc), jnp.float32).at[: w.shape[0], : w.shape[1]].set(w)

    # Layer-1 projections fused into one small matmul: X @ [Wl1^T | Wr1^T].
    w1cat = jnp.concatenate([pad2(params["wl1"].T, f_pad, h_pad),
                             pad2(params["wr1"].T, f_pad, h_pad)], axis=1)
    b1 = pad2(params["b1"].reshape(1, -1), 1, h_pad)
    wl2 = pad2(params["wl2"].T, h_pad, c_pad)
    wr2 = pad2(params["wr2"].T, h_pad, c_pad)
    b2 = pad2(params["b2"].reshape(1, -1), 1, c_pad)

    proj = _preproject(x_pad, w1cat)                # (N_pad, 2*H_pad) f32 (Pallas)
    xwl_bf = proj[:, :h_pad].astype(jnp.bfloat16)   # streamed bf16 aggregation input
    xwr = proj[:, h_pad:]                           # f32 self-path term

    kernel = _make_sage_kernel(tm, tk, c)

    out_pad = pl.pallas_call(
        kernel,
        out_shape=jax.ShapeDtypeStruct((n_pad, c_pad), jnp.float32),
        grid_spec=pltpu.PrefetchScalarGridSpec(
            num_scalar_prefetch=0,
            grid=(2, ni, nk),
            in_specs=[
                # A tiles (int8): the dominant HBM stream, pipeline double-buffered.
                pl.BlockSpec((tm, tk), lambda p, i, k: (i, k)),
                # 1/deg column for the current row tile.
                pl.BlockSpec((tm, 1), lambda p, i, k: (i, 0)),
                # X@Wl1^T (bf16) resident in VMEM; sliced along k in-kernel.
                pl.BlockSpec((n_pad, h_pad), lambda p, i, k: (0, 0)),
                # X@Wr1^T rows for the current row tile (self path of layer 1).
                pl.BlockSpec((tm, h_pad), lambda p, i, k: (i, 0)),
                pl.BlockSpec((1, h_pad), lambda p, i, k: (0, 0)),       # b1
                pl.BlockSpec((h_pad, c_pad), lambda p, i, k: (0, 0)),   # Wl2^T
                pl.BlockSpec((h_pad, c_pad), lambda p, i, k: (0, 0)),   # Wr2^T
                pl.BlockSpec((1, c_pad), lambda p, i, k: (0, 0)),       # b2
            ],
            # Parked on block 0 during phase 0 (never written), advances with the
            # row tile during phase 1 -> each output block is written exactly once.
            out_specs=pl.BlockSpec((tm, c_pad), lambda p, i, k: (p * i, 0)),
            scratch_shapes=[
                pltpu.VMEM((n_pad, h_pad), jnp.bfloat16),  # h resident across layers
                pltpu.VMEM((tm, h_pad), jnp.float32),      # shared aggregation acc
            ],
        ),
        compiler_params=pltpu.CompilerParams(
            # Layer 2 reads the core-private VMEM h written by layer 1, so no grid
            # axis can be megacore-sharded in this fused single-kernel form.
            dimension_semantics=("arbitrary", "arbitrary", "arbitrary"),
            vmem_limit_bytes=48 * 1024 * 1024,
        ),
    )(adj_i8, deg_inv, xwl_bf, xwr, b1, wl2, wr2, b2)

    return out_pad[:n, :c]


# ---------------------------------------------------------------------------
# Pure-JAX reference (for correctness check) and parameter init.
# ---------------------------------------------------------------------------
def _sage_ref(x, edge_index, params):
    n = x.shape[0]
    src, dst = edge_index[0], edge_index[1]

    def conv(feat, wl, b, wr):
        agg = jnp.zeros((n, feat.shape[1]), jnp.float32).at[dst].add(feat[src])
        cnt = jnp.zeros((n, 1), jnp.float32).at[dst].add(1.0)
        agg = jnp.where(cnt > 0, agg / jnp.maximum(cnt, 1.0), 0.0)
        return agg @ wl.T + b + feat @ wr.T

    h = jax.nn.relu(conv(x, params["wl1"], params["b1"], params["wr1"]))
    z = conv(h, params["wl2"], params["b2"], params["wr2"])
    return jax.nn.log_softmax(z, axis=1)


def init_params(key, num_features, num_classes, hidden_dim=64):
    ks = jax.random.split(key, 6)

    def lin(k, fan_in, fan_out):
        bound = 1.0 / jnp.sqrt(fan_in)
        return jax.random.uniform(k, (fan_out, fan_in), jnp.float32, -bound, bound)

    return {
        "wl1": lin(ks[0], num_features, hidden_dim),    # conv1.lin_l.weight
        "b1":  jax.random.uniform(ks[1], (hidden_dim,), jnp.float32,
                                  -1.0 / jnp.sqrt(num_features),
                                  1.0 / jnp.sqrt(num_features)),
        "wr1": lin(ks[2], num_features, hidden_dim),    # conv1.lin_r.weight (no bias)
        "wl2": lin(ks[3], hidden_dim, num_classes),     # conv2.lin_l.weight
        "b2":  jax.random.uniform(ks[4], (num_classes,), jnp.float32,
                                  -1.0 / jnp.sqrt(hidden_dim),
                                  1.0 / jnp.sqrt(hidden_dim)),
        "wr2": lin(ks[5], hidden_dim, num_classes),     # conv2.lin_r.weight (no bias)
    }


if __name__ == "__main__":
    key = jax.random.PRNGKey(0)
    k_x, k_p = jax.random.split(key)

    num_nodes = 16
    num_features = 8
    hidden_dim = 32
    num_classes = 4

    x = jax.random.normal(k_x, (num_nodes, num_features), jnp.float32)

    # deterministic small graph: directed ring + skip-2 edges
    src = jnp.concatenate([jnp.arange(num_nodes), jnp.arange(num_nodes)])
    dst = jnp.concatenate([(jnp.arange(num_nodes) + 1) % num_nodes,
                           (jnp.arange(num_nodes) + 2) % num_nodes])
    edge_index = jnp.stack([src, dst]).astype(jnp.int32)   # [2, E]

    params = init_params(k_p, num_features, num_classes, hidden_dim)

    out = sage_forward(x, edge_index, params)
    jax.block_until_ready(out)

    assert out.shape == (num_nodes, num_classes)
    # rows of log_softmax must exp-sum to 1
    assert bool(jnp.allclose(jnp.sum(jnp.exp(out), axis=1), 1.0, atol=1e-5))
    assert bool(jnp.all(jnp.isfinite(out)))
    # match the exact-f32 reference within bf16 aggregation tolerance
    ref = _sage_ref(x, edge_index, params)
    assert bool(jnp.allclose(out, ref, atol=5e-2, rtol=0.0))
    print("KERNEL_OK")
</pallas_src>

<mosaic_0001>
module attributes {stable_mosaic.version = 11 : i64} {
  func.func @_proj_kernel(%arg0: i32, %arg1: i32, %arg2: memref<128x128xf32, #tpu.memory_space<vmem>>, %arg3: memref<128x256xf32, #tpu.memory_space<vmem>>, %arg4: memref<128x256xf32, #tpu.memory_space<vmem>>, %arg5: memref<128x256xf32, #tpu.memory_space<vmem>>) attributes {dimension_semantics = [#tpu.dimension_semantics<parallel>, #tpu.dimension_semantics<arbitrary>], iteration_bounds = array<i64: 1, 1>, scalar_prefetch = 0 : i64, scratch_operands = 1 : i64, tpu.core_type = #tpu.core_type<tc>, window_params = [{transform_indices = @transform_0, window_bounds = array<i64: 128, 128>}, {transform_indices = @transform_1, window_bounds = array<i64: 128, 256>}, {transform_indices = @transform_2, window_bounds = array<i64: 128, 256>}]} {
    %c0_i32 = arith.constant 0 : i32
    %0 = arith.cmpi eq, %arg1, %c0_i32 : i32
    %1 = arith.extui %0 : i1 to i32
    %c0_i32_0 = arith.constant 0 : i32
    %2 = arith.cmpi ne, %1, %c0_i32_0 : i32
    scf.if %2 {
      %cst_10 = arith.constant 0.000000e+00 : f32
      %12 = vector.broadcast %cst_10 : f32 to vector<128x256xf32>
      %c0_11 = arith.constant 0 : index
      %c0_12 = arith.constant 0 : index
      %13 = vector.load %arg5[%c0_11, %c0_12] : memref<128x256xf32, #tpu.memory_space<vmem>>, vector<128x256xf32>
      tpu.vector_store %arg5[%c0_11, %c0_12], %12 {strides = array<i32>} : memref<128x256xf32, #tpu.memory_space<vmem>>, vector<128x256xf32>,
    } else {
    }
    %c0 = arith.constant 0 : index
    %c0_1 = arith.constant 0 : index
    %3 = vector.load %arg5[%c0, %c0_1] : memref<128x256xf32, #tpu.memory_space<vmem>>, vector<128x256xf32>
    %c0_2 = arith.constant 0 : index
    %c0_3 = arith.constant 0 : index
    %4 = vector.load %arg2[%c0_2, %c0_3] : memref<128x128xf32, #tpu.memory_space<vmem>>, vector<128x128xf32>
    %c0_4 = arith.constant 0 : index
    %c0_5 = arith.constant 0 : index
    %5 = vector.load %arg3[%c0_4, %c0_5] : memref<128x256xf32, #tpu.memory_space<vmem>>, vector<128x256xf32>
    %cst = arith.constant dense<0.000000e+00> : vector<128x256xf32>
    %6 = tpu.matmul %4, %5, %cst {dimension_numbers = #tpu.dot_dimension_numbers<[1], [0], [0], [1], [0, 0, 1, 1], [], []>} : vector<128x128xf32>, vector<128x256xf32>, vector<128x256xf32> -> vector<128x256xf32>
    %7 = arith.addf %3, %6 : vector<128x256xf32>
    %c0_6 = arith.constant 0 : index
    %c0_7 = arith.constant 0 : index
    %8 = vector.load %arg5[%c0_6, %c0_7] : memref<128x256xf32, #tpu.memory_space<vmem>>, vector<128x256xf32>
    tpu.vector_store %arg5[%c0_6, %c0_7], %7 {strides = array<i32>} : memref<128x256xf32, #tpu.memory_space<vmem>>, vector<128x256xf32>,
    %c0_i32_8 = arith.constant 0 : i32
    %9 = arith.cmpi eq, %arg1, %c0_i32_8 : i32
    %10 = arith.extui %9 : i1 to i32
    %c0_i32_9 = arith.constant 0 : i32
    %11 = arith.cmpi ne, %10, %c0_i32_9 : i32
    scf.if %11 {
      %c0_10 = arith.constant 0 : index
      %c0_11 = arith.constant 0 : index
      %12 = vector.load %arg5[%c0_10, %c0_11] : memref<128x256xf32, #tpu.memory_space<vmem>>, vector<128x256xf32>
      %c0_12 = arith.constant 0 : index
      %c0_13 = arith.constant 0 : index
      %13 = vector.load %arg4[%c0_12, %c0_13] : memref<128x256xf32, #tpu.memory_space<vmem>>, vector<128x256xf32>
      tpu.vector_store %arg4[%c0_12, %c0_13], %12 {strides = array<i32>} : memref<128x256xf32, #tpu.memory_space<vmem>>, vector<128x256xf32>,
    } else {
    }
    return
  }
  func.func @transform_0(%arg0: i32, %arg1: i32) -> (i32, i32) {
    %c0_i32 = arith.constant 0 : i32
    return %arg0, %arg1 : i32, i32
  }
  func.func @transform_1(%arg0: i32, %arg1: i32) -> (i32, i32) {
    %c0_i32 = arith.constant 0 : i32
    %c0_i32_0 = arith.constant 0 : i32
    return %arg1, %c0_i32 : i32, i32
  }
  func.func @transform_2(%arg0: i32, %arg1: i32) -> (i32, i32) {
    %c0_i32 = arith.constant 0 : i32
    %c0_i32_0 = arith.constant 0 : i32
    return %arg0, %c0_i32 : i32, i32
  }
}

</mosaic_0001>

<llo_original>
// kernel: tpu_custom_call.1
$region0: #{tpu_custom_call.1}
  #allocation0 [shape = 'u32[]', space=smem, size = 0x4, offset = 0x4, fixed_abs, tag = 'smem constant byte address 0x4 - core index']
  #allocation1 [shape = 'u32[72,128]{1,0:T(1,128)}', space=vmem, size = 0x9000, scoped, tag = 'internal scratch']
  #allocation2 [shape = 'f32[128,256]{1,0:T(8,128)}', space=vmem, size = 0x20000, scoped, tag = 'scratch operand']
  %s0 = inlined_call_operand.hbm [shape: f32[128,128], index: 0, kind: input, shape index: {}]
  %s1 = inlined_call_operand.hbm [shape: f32[128,256], index: 1, kind: input, shape index: {}]
  %s2 = inlined_call_operand.hbm [shape: f32[128,256], index: 2, kind: output, shape index: {}]
  %s3 = sld [smem:[#allocation0]]
  $region34: #{tpu_custom_call.1} parent=0
    _
  %s5 = ssub.s32 1, %s3
  %s6 = scalar_select 0, %s5, %s3
  $region1: #{tpu_custom_call.1} parent=0
    #allocation3 [shape = 'u8[65536]{0}', space=vmem, size = 0x10000, scoped, tag = 'input window, operand 0, single buffered']
    #allocation4 [shape = 's32[1]{0}', space=sflag, size = 0x4, scoped, tag = 'scoped memory for tpu_custom_call.1']
    #allocation5 [shape = 's32[1]{0}', space=sflag, size = 0x4, scoped, tag = 'scoped memory for tpu_custom_call.1']
    #allocation6 [shape = 'u8[131072]{0}', space=vmem, size = 0x20000, scoped, tag = 'input window, operand 1, single buffered']
    #allocation7 [shape = 's32[1]{0}', space=sflag, size = 0x4, scoped, tag = 'scoped memory for tpu_custom_call.1']
    #allocation8 [shape = 'u8[131072]{0}', space=vmem, size = 0x20000, scoped, tag = 'output window, operand 0, single buffered']
    %7 = vsyncpa [#allocation4], 0
    %8 = vsyncpa [#allocation7], 0
    %9 = vsyncpa [#allocation5], 0
    // Predicated region
    $region2: #{tpu_custom_call.1} parent=1 // pred_check
      _
    $region3: #{tpu_custom_call.1} parent=1 // pred_check_branch
      %11 = sbr.rel (0) target = $region5
    $region4: #{tpu_custom_call.1} parent=1 // pred_region
      %13 = vsyncadd [#allocation4], 0
      %s14 = sshll.u32 %s0, 4
      %s15 = int_to_ptr.hbm [resolvable:$true] %s14
      %s16 = sshll.u32 [#allocation3], 4
      %s17 = int_to_ptr.vmem [resolvable:$true] %s16
      %22 = dma.hbm_to_vmem [thread:$0]  %s15, 2048, %s17, [#allocation4], 128, 128, 8
    $region5: #{tpu_custom_call.1} parent=1 // pred_fallthru
      _
    // Predicated region
    $region6: #{tpu_custom_call.1} parent=1 // pred_check
      _
    $region7: #{tpu_custom_call.1} parent=1 // pred_check_branch
      %24 = sbr.rel (0) target = $region9
    $region8: #{tpu_custom_call.1} parent=1 // pred_region
      %26 = vsyncadd [#allocation7], 0
      %s27 = sshll.u32 %s1, 4
      %s28 = int_to_ptr.hbm [resolvable:$true] %s27
      %s29 = sshll.u32 [#allocation6], 4
      %s30 = int_to_ptr.vmem [resolvable:$true] %s29
      %35 = dma.hbm_to_vmem [thread:$0]  %s28, 4096, %s30, [#allocation7], 256, 256, 16
    $region9: #{tpu_custom_call.1} parent=1 // pred_fallthru
      _
    // Predicated region
    $region10: #{tpu_custom_call.1} parent=1 // pred_check
      _
    $region11: #{tpu_custom_call.1} parent=1 // pred_check_branch
      %37 = sbr.rel (0) target = $region13
    $region12: #{tpu_custom_call.1} parent=1 // pred_region
      %39 = dma.done [#allocation4], 2048
    $region13: #{tpu_custom_call.1} parent=1 // pred_fallthru
      _
    // Predicated region
    $region14: #{tpu_custom_call.1} parent=1 // pred_check
      _
    $region15: #{tpu_custom_call.1} parent=1 // pred_check_branch
      %41 = sbr.rel (0) target = $region17
    $region16: #{tpu_custom_call.1} parent=1 // pred_region
      %43 = dma.done [#allocation7], 4096
    $region17: #{tpu_custom_call.1} parent=1 // pred_fallthru
      _
    %p44 = scmp.eq.s32.totalorder 0, 0
    // Predicated region
    $region18: #{tpu_custom_call.1} parent=1 // pred_check
      %p45 = pneg %p44
    $region19: #{tpu_custom_call.1} parent=1 // pred_check_branch
      %47 = sbr.rel (%p45) target = $region21
    $region20: #{tpu_custom_call.1} parent=1 // pred_region
      %48 = vst [vmem:[#allocation2] sm:$0xff] 0.0
      %49 = vst [vmem:[#allocation2 + $0x8] sm:$0xff] 0.0
      %50 = vst [vmem:[#allocation2 + $0x10] sm:$0xff] 0.0
      %51 = vst [vmem:[#allocation2 + $0x18] sm:$0xff] 0.0
      %52 = vst [vmem:[#allocation2 + $0x20] sm:$0xff] 0.0
      %53 = vst [vmem:[#allocation2 + $0x28] sm:$0xff] 0.0
      %54 = vst [vmem:[#allocation2 + $0x30] sm:$0xff] 0.0
      %55 = vst [vmem:[#allocation2 + $0x38] sm:$0xff] 0.0
      %56 = vst [vmem:[#allocation2 + $0x40] sm:$0xff] 0.0
      %57 = vst [vmem:[#allocation2 + $0x48] sm:$0xff] 0.0
      %58 = vst [vmem:[#allocation2 + $0x50] sm:$0xff] 0.0
      %59 = vst [vmem:[#allocation2 + $0x58] sm:$0xff] 0.0
      %60 = vst [vmem:[#allocation2 + $0x60] sm:$0xff] 0.0
      %61 = vst [vmem:[#allocation2 + $0x68] sm:$0xff] 0.0
      %62 = vst [vmem:[#allocation2 + $0x70] sm:$0xff] 0.0
      %63 = vst [vmem:[#allocation2 + $0x78] sm:$0xff] 0.0
      %64 = vst [vmem:[#allocation2 + $0x80] sm:$0xff] 0.0
      %65 = vst [vmem:[#allocation2 + $0x88] sm:$0xff] 0.0
      %66 = vst [vmem:[#allocation2 + $0x90] sm:$0xff] 0.0
      %67 = vst [vmem:[#allocation2 + $0x98] sm:$0xff] 0.0
      %68 = vst [vmem:[#allocation2 + $0xa0] sm:$0xff] 0.0
      %69 = vst [vmem:[#allocation2 + $0xa8] sm:$0xff] 0.0
      %70 = vst [vmem:[#allocation2 + $0xb0] sm:$0xff] 0.0
      %71 = vst [vmem:[#allocation2 + $0xb8] sm:$0xff] 0.0
      %72 = vst [vmem:[#allocation2 + $0xc0] sm:$0xff] 0.0
      %73 = vst [vmem:[#allocation2 + $0xc8] sm:$0xff] 0.0
      %74 = vst [vmem:[#allocation2 + $0xd0] sm:$0xff] 0.0
      %75 = vst [vmem:[#allocation2 + $0xd8] sm:$0xff] 0.0
      %76 = vst [vmem:[#allocation2 + $0xe0] sm:$0xff] 0.0
      %77 = vst [vmem:[#allocation2 + $0xe8] sm:$0xff] 0.0
      %78 = vst [vmem:[#allocation2 + $0xf0] sm:$0xff] 0.0
      %79 = vst [vmem:[#allocation2 + $0xf8] sm:$0xff] 0.0
    $region21: #{tpu_custom_call.1} parent=1 // pred_fallthru
      _
    %v80 = vld [vmem:[#allocation2] sm:$0xff]
    %v81 = vld [vmem:[#allocation2 + $0x8] sm:$0xff]
    %v82 = vld [vmem:[#allocation2 + $0x10] sm:$0xff]
    %v83 = vld [vmem:[#allocation2 + $0x18] sm:$0xff]
    %v84 = vld [vmem:[#allocation2 + $0x20] sm:$0xff]
    %v85 = vld [vmem:[#allocation2 + $0x28] sm:$0xff]
    %v86 = vld [vmem:[#allocation2 + $0x30] sm:$0xff]
    %v87 = vld [vmem:[#allocation2 + $0x38] sm:$0xff]
    %v88 = vld [vmem:[#allocation2 + $0x40] sm:$0xff]
    %v89 = vld [vmem:[#allocation2 + $0x48] sm:$0xff]
    %v90 = vld [vmem:[#allocation2 + $0x50] sm:$0xff]
    %v91 = vld [vmem:[#allocation2 + $0x58] sm:$0xff]
    %v92 = vld [vmem:[#allocation2 + $0x60] sm:$0xff]
    %v93 = vld [vmem:[#allocation2 + $0x68] sm:$0xff]
    %v94 = vld [vmem:[#allocation2 + $0x70] sm:$0xff]
    %v95 = vld [vmem:[#allocation2 + $0x78] sm:$0xff]
    %v96 = vld [vmem:[#allocation2 + $0x80] sm:$0xff]
    %v97 = vld [vmem:[#allocation2 + $0x88] sm:$0xff]
    %v98 = vld [vmem:[#allocation2 + $0x90] sm:$0xff]
    %v99 = vld [vmem:[#allocation2 + $0x98] sm:$0xff]
    %v100 = vld [vmem:[#allocation2 + $0xa0] sm:$0xff]
    %v101 = vld [vmem:[#allocation2 + $0xa8] sm:$0xff]
    %v102 = vld [vmem:[#allocation2 + $0xb0] sm:$0xff]
    %v103 = vld [vmem:[#allocation2 + $0xb8] sm:$0xff]
    %v104 = vld [vmem:[#allocation2 + $0xc0] sm:$0xff]
    %v105 = vld [vmem:[#allocation2 + $0xc8] sm:$0xff]
    %v106 = vld [vmem:[#allocation2 + $0xd0] sm:$0xff]
    %v107 = vld [vmem:[#allocation2 + $0xd8] sm:$0xff]
    %v108 = vld [vmem:[#allocation2 + $0xe0] sm:$0xff]
    %v109 = vld [vmem:[#allocation2 + $0xe8] sm:$0xff]
    %v110 = vld [vmem:[#allocation2 + $0xf0] sm:$0xff]
    %v111 = vld [vmem:[#allocation2 + $0xf8] sm:$0xff]
    %v112 = vld [vmem:[#allocation3] sm:$0xff]
    %v113 = vld [vmem:[#allocation3 + $0x8] sm:$0xff]
    %v114 = vld [vmem:[#allocation3 + $0x10] sm:$0xff]
    %v115 = vld [vmem:[#allocation3 + $0x18] sm:$0xff]
    %v116 = vld [vmem:[#allocation3 + $0x20] sm:$0xff]
    %v117 = vld [vmem:[#allocation3 + $0x28] sm:$0xff]
    %v118 = vld [vmem:[#allocation3 + $0x30] sm:$0xff]
    %v119 = vld [vmem:[#allocation3 + $0x38] sm:$0xff]
    %v120 = vld [vmem:[#allocation3 + $0x40] sm:$0xff]
    %v121 = vld [vmem:[#allocation3 + $0x48] sm:$0xff]
    %v122 = vld [vmem:[#allocation3 + $0x50] sm:$0xff]
    %v123 = vld [vmem:[#allocation3 + $0x58] sm:$0xff]
    %v124 = vld [vmem:[#allocation3 + $0x60] sm:$0xff]
    %v125 = vld [vmem:[#allocation3 + $0x68] sm:$0xff]
    %v126 = vld [vmem:[#allocation3 + $0x70] sm:$0xff]
    %v127 = vld [vmem:[#allocation3 + $0x78] sm:$0xff]
    %v128 = vld [vmem:[#allocation6] sm:$0xff]
    %v129 = vld [vmem:[#allocation6 + $0x8] sm:$0xff]
    %v130 = vld [vmem:[#allocation6 + $0x10] sm:$0xff]
    %v131 = vld [vmem:[#allocation6 + $0x18] sm:$0xff]
    %v132 = vld [vmem:[#allocation6 + $0x20] sm:$0xff]
    %v133 = vld [vmem:[#allocation6 + $0x28] sm:$0xff]
    %v134 = vld [vmem:[#allocation6 + $0x30] sm:$0xff]
    %v135 = vld [vmem:[#allocation6 + $0x38] sm:$0xff]
    %v136 = vld [vmem:[#allocation6 + $0x40] sm:$0xff]
    %v137 = vld [vmem:[#allocation6 + $0x48] sm:$0xff]
    %v138 = vld [vmem:[#allocation6 + $0x50] sm:$0xff]
    %v139 = vld [vmem:[#allocation6 + $0x58] sm:$0xff]
    %v140 = vld [vmem:[#allocation6 + $0x60] sm:$0xff]
    %v141 = vld [vmem:[#allocation6 + $0x68] sm:$0xff]
    %v142 = vld [vmem:[#allocation6 + $0x70] sm:$0xff]
    %v143 = vld [vmem:[#allocation6 + $0x78] sm:$0xff]
    %v144 = vld [vmem:[#allocation6 + $0x80] sm:$0xff]
    %v145 = vld [vmem:[#allocation6 + $0x88] sm:$0xff]
    %v146 = vld [vmem:[#allocation6 + $0x90] sm:$0xff]
    %v147 = vld [vmem:[#allocation6 + $0x98] sm:$0xff]
    %v148 = vld [vmem:[#allocation6 + $0xa0] sm:$0xff]
    %v149 = vld [vmem:[#allocation6 + $0xa8] sm:$0xff]
    %v150 = vld [vmem:[#allocation6 + $0xb0] sm:$0xff]
    %v151 = vld [vmem:[#allocation6 + $0xb8] sm:$0xff]
    %v152 = vld [vmem:[#allocation6 + $0xc0] sm:$0xff]
    %v153 = vld [vmem:[#allocation6 + $0xc8] sm:$0xff]
    %v154 = vld [vmem:[#allocation6 + $0xd0] sm:$0xff]
    %v155 = vld [vmem:[#allocation6 + $0xd8] sm:$0xff]
    %v156 = vld [vmem:[#allocation6 + $0xe0] sm:$0xff]
    %v157 = vld [vmem:[#allocation6 + $0xe8] sm:$0xff]
    %v158 = vld [vmem:[#allocation6 + $0xf0] sm:$0xff]
    %v159 = vld [vmem:[#allocation6 + $0xf8] sm:$0xff]
    %160 = vmatpush.msra.mxu0 %v158
    %161 = vmatpush.msra.mxu0 %v156
    %162 = vmatpush.msra.mxu0 %v154
    %163 = vmatpush.msra.mxu0 %v152
    %164 = vmatpush.msra.mxu0 %v150
    %165 = vmatpush.msra.mxu0 %v148
    %166 = vmatpush.msra.mxu0 %v146
    %167 = vmatpush.msra.mxu0 %v144
    %168 = vmatpush.msra.mxu0 %v142
    %169 = vmatpush.msra.mxu0 %v140
    %170 = vmatpush.msra.mxu0 %v138
    %171 = vmatpush.msra.mxu0 %v136
    %172 = vmatpush.msra.mxu0 %v134
    %173 = vmatpush.msra.mxu0 %v132
    %174 = vmatpush.msra.mxu0 %v130
    %175 = vmatpush.msra.mxu0 %v128
    %176 = vmatmul.f32.gmra.mxu0 %v112
    %v177 = vpop.f32.mrf.mxu0
    %v178 = vadd.f32 0.0, %v177
    %179 = vmatmul.f32.gmra.mxu0 %v113
    %v180 = vpop.f32.mrf.mxu0
    %v181 = vadd.f32 0.0, %v180
    %182 = vmatmul.f32.gmra.mxu0 %v114
    %v183 = vpop.f32.mrf.mxu0
    %v184 = vadd.f32 0.0, %v183
    %185 = vmatmul.f32.gmra.mxu0 %v115
    %v186 = vpop.f32.mrf.mxu0
    %v187 = vadd.f32 0.0, %v186
    %188 = vmatmul.f32.gmra.mxu0 %v116
    %v189 = vpop.f32.mrf.mxu0
    %v190 = vadd.f32 0.0, %v189
    %191 = vmatmul.f32.gmra.mxu0 %v117
    %v192 = vpop.f32.mrf.mxu0
    %v193 = vadd.f32 0.0, %v192
    %194 = vmatmul.f32.gmra.mxu0 %v118
    %v195 = vpop.f32.mrf.mxu0
    %v196 = vadd.f32 0.0, %v195
    %197 = vmatmul.f32.gmra.mxu0 %v119
    %v198 = vpop.f32.mrf.mxu0
    %v199 = vadd.f32 0.0, %v198
    %200 = vmatmul.f32.gmra.mxu0 %v120
    %v201 = vpop.f32.mrf.mxu0
    %v202 = vadd.f32 0.0, %v201
    %203 = vmatmul.f32.gmra.mxu0 %v121
    %v204 = vpop.f32.mrf.mxu0
    %v205 = vadd.f32 0.0, %v204
    %206 = vmatmul.f32.gmra.mxu0 %v122
    %v207 = vpop.f32.mrf.mxu0
    %v208 = vadd.f32 0.0, %v207
    %209 = vmatmul.f32.gmra.mxu0 %v123
    %v210 = vpop.f32.mrf.mxu0
    %v211 = vadd.f32 0.0, %v210
    %212 = vmatmul.f32.gmra.mxu0 %v124
    %v213 = vpop.f32.mrf.mxu0
    %v214 = vadd.f32 0.0, %v213
    %215 = vmatmul.f32.gmra.mxu0 %v125
    %v216 = vpop.f32.mrf.mxu0
    %v217 = vadd.f32 0.0, %v216
    %218 = vmatmul.f32.gmra.mxu0 %v126
    %v219 = vpop.f32.mrf.mxu0
    %v220 = vadd.f32 0.0, %v219
    %221 = vmatmul.f32.gmra.mxu0 %v127
    %v222 = vpop.f32.mrf.mxu0
    %v223 = vadd.f32 0.0, %v222
    %224 = vdwg.mxu0
    %225 = vmatpush.msra.mxu0 %v159
    %226 = vmatpush.msra.mxu0 %v157
    %227 = vmatpush.msra.mxu0 %v155
    %228 = vmatpush.msra.mxu0 %v153
    %229 = vmatpush.msra.mxu0 %v151
    %230 = vmatpush.msra.mxu0 %v149
    %231 = vmatpush.msra.mxu0 %v147
    %232 = vmatpush.msra.mxu0 %v145
    %233 = vmatpush.msra.mxu0 %v143
    %234 = vmatpush.msra.mxu0 %v141
    %235 = vmatpush.msra.mxu0 %v139
    %236 = vmatpush.msra.mxu0 %v137
    %237 = vmatpush.msra.mxu0 %v135
    %238 = vmatpush.msra.mxu0 %v133
    %239 = vmatpush.msra.mxu0 %v131
    %240 = vmatpush.msra.mxu0 %v129
    %241 = vmatmul.f32.gmra.mxu0 %v112
    %v242 = vpop.f32.mrf.mxu0
    %v243 = vadd.f32 0.0, %v242
    %244 = vmatmul.f32.gmra.mxu0 %v113
    %v245 = vpop.f32.mrf.mxu0
    %v246 = vadd.f32 0.0, %v245
    %247 = vmatmul.f32.gmra.mxu0 %v114
    %v248 = vpop.f32.mrf.mxu0
    %v249 = vadd.f32 0.0, %v248
    %250 = vmatmul.f32.gmra.mxu0 %v115
    %v251 = vpop.f32.mrf.mxu0
    %v252 = vadd.f32 0.0, %v251
    %253 = vmatmul.f32.gmra.mxu0 %v116
    %v254 = vpop.f32.mrf.mxu0
    %v255 = vadd.f32 0.0, %v254
    %256 = vmatmul.f32.gmra.mxu0 %v117
    %v257 = vpop.f32.mrf.mxu0
    %v258 = vadd.f32 0.0, %v257
    %259 = vmatmul.f32.gmra.mxu0 %v118
    %v260 = vpop.f32.mrf.mxu0
    %v261 = vadd.f32 0.0, %v260
    %262 = vmatmul.f32.gmra.mxu0 %v119
    %v263 = vpop.f32.mrf.mxu0
    %v264 = vadd.f32 0.0, %v263
    %265 = vmatmul.f32.gmra.mxu0 %v120
    %v266 = vpop.f32.mrf.mxu0
    %v267 = vadd.f32 0.0, %v266
    %268 = vmatmul.f32.gmra.mxu0 %v121
    %v269 = vpop.f32.mrf.mxu0
    %v270 = vadd.f32 0.0, %v269
    %271 = vmatmul.f32.gmra.mxu0 %v122
    %v272 = vpop.f32.mrf.mxu0
    %v273 = vadd.f32 0.0, %v272
    %274 = vmatmul.f32.gmra.mxu0 %v123
    %v275 = vpop.f32.mrf.mxu0
    %v276 = vadd.f32 0.0, %v275
    %277 = vmatmul.f32.gmra.mxu0 %v124
    %v278 = vpop.f32.mrf.mxu0
    %v279 = vadd.f32 0.0, %v278
    %280 = vmatmul.f32.gmra.mxu0 %v125
    %v281 = vpop.f32.mrf.mxu0
    %v282 = vadd.f32 0.0, %v281
    %283 = vmatmul.f32.gmra.mxu0 %v126
    %v284 = vpop.f32.mrf.mxu0
    %v285 = vadd.f32 0.0, %v284
    %286 = vmatmul.f32.gmra.mxu0 %v127
    %v287 = vpop.f32.mrf.mxu0
    %v288 = vadd.f32 0.0, %v287
    %289 = vdwg.mxu0
    %v290 = vadd.f32 %v80, %v178
    %v291 = vadd.f32 %v81, %v243
    %v292 = vadd.f32 %v82, %v181
    %v293 = vadd.f32 %v83, %v246
    %v294 = vadd.f32 %v84, %v184
    %v295 = vadd.f32 %v85, %v249
    %v296 = vadd.f32 %v86, %v187
    %v297 = vadd.f32 %v87, %v252
    %v298 = vadd.f32 %v88, %v190
    %v299 = vadd.f32 %v89, %v255
    %v300 = vadd.f32 %v90, %v193
    %v301 = vadd.f32 %v91, %v258
    %v302 = vadd.f32 %v92, %v196
    %v303 = vadd.f32 %v93, %v261
    %v304 = vadd.f32 %v94, %v199
    %v305 = vadd.f32 %v95, %v264
    %v306 = vadd.f32 %v96, %v202
    %v307 = vadd.f32 %v97, %v267
    %v308 = vadd.f32 %v98, %v205
    %v309 = vadd.f32 %v99, %v270
    %v310 = vadd.f32 %v100, %v208
    %v311 = vadd.f32 %v101, %v273
    %v312 = vadd.f32 %v102, %v211
    %v313 = vadd.f32 %v103, %v276
    %v314 = vadd.f32 %v104, %v214
    %v315 = vadd.f32 %v105, %v279
    %v316 = vadd.f32 %v106, %v217
    %v317 = vadd.f32 %v107, %v282
    %v318 = vadd.f32 %v108, %v220
    %v319 = vadd.f32 %v109, %v285
    %v320 = vadd.f32 %v110, %v223
    %v321 = vadd.f32 %v111, %v288
    %322 = vst [vmem:[#allocation2] sm:$0xff] %v290
    %323 = vst [vmem:[#allocation2 + $0x8] sm:$0xff] %v291
    %324 = vst [vmem:[#allocation2 + $0x10] sm:$0xff] %v292
    %325 = vst [vmem:[#allocation2 + $0x18] sm:$0xff] %v293
    %326 = vst [vmem:[#allocation2 + $0x20] sm:$0xff] %v294
    %327 = vst [vmem:[#allocation2 + $0x28] sm:$0xff] %v295
    %328 = vst [vmem:[#allocation2 + $0x30] sm:$0xff] %v296
    %329 = vst [vmem:[#allocation2 + $0x38] sm:$0xff] %v297
    %330 = vst [vmem:[#allocation2 + $0x40] sm:$0xff] %v298
    %331 = vst [vmem:[#allocation2 + $0x48] sm:$0xff] %v299
    %332 = vst [vmem:[#allocation2 + $0x50] sm:$0xff] %v300
    %333 = vst [vmem:[#allocation2 + $0x58] sm:$0xff] %v301
    %334 = vst [vmem:[#allocation2 + $0x60] sm:$0xff] %v302
    %335 = vst [vmem:[#allocation2 + $0x68] sm:$0xff] %v303
    %336 = vst [vmem:[#allocation2 + $0x70] sm:$0xff] %v304
    %337 = vst [vmem:[#allocation2 + $0x78] sm:$0xff] %v305
    %338 = vst [vmem:[#allocation2 + $0x80] sm:$0xff] %v306
    %339 = vst [vmem:[#allocation2 + $0x88] sm:$0xff] %v307
    %340 = vst [vmem:[#allocation2 + $0x90] sm:$0xff] %v308
    %341 = vst [vmem:[#allocation2 + $0x98] sm:$0xff] %v309
    %342 = vst [vmem:[#allocation2 + $0xa0] sm:$0xff] %v310
    %343 = vst [vmem:[#allocation2 + $0xa8] sm:$0xff] %v311
    %344 = vst [vmem:[#allocation2 + $0xb0] sm:$0xff] %v312
    %345 = vst [vmem:[#allocation2 + $0xb8] sm:$0xff] %v313
    %346 = vst [vmem:[#allocation2 + $0xc0] sm:$0xff] %v314
    %347 = vst [vmem:[#allocation2 + $0xc8] sm:$0xff] %v315
    %348 = vst [vmem:[#allocation2 + $0xd0] sm:$0xff] %v316
    %349 = vst [vmem:[#allocation2 + $0xd8] sm:$0xff] %v317
    %350 = vst [vmem:[#allocation2 + $0xe0] sm:$0xff] %v318
    %351 = vst [vmem:[#allocation2 + $0xe8] sm:$0xff] %v319
    %352 = vst [vmem:[#allocation2 + $0xf0] sm:$0xff] %v320
    %353 = vst [vmem:[#allocation2 + $0xf8] sm:$0xff] %v321
    // Predicated region
    $region22: #{tpu_custom_call.1} parent=1 // pred_check
      %p354 = pneg %p44
    $region23: #{tpu_custom_call.1} parent=1 // pred_check_branch
      %356 = sbr.rel (%p354) target = $region25
    $region24: #{tpu_custom_call.1} parent=1 // pred_region
      %v357 = vld [vmem:[#allocation2] sm:$0xff]
      %v358 = vld [vmem:[#allocation2 + $0x8] sm:$0xff]
      %v359 = vld [vmem:[#allocation2 + $0x10] sm:$0xff]
      %v360 = vld [vmem:[#allocation2 + $0x18] sm:$0xff]
      %v361 = vld [vmem:[#allocation2 + $0x20] sm:$0xff]
      %v362 = vld [vmem:[#allocation2 + $0x28] sm:$0xff]
      %v363 = vld [vmem:[#allocation2 + $0x30] sm:$0xff]
      %v364 = vld [vmem:[#allocation2 + $0x38] sm:$0xff]
      %v365 = vld [vmem:[#allocation2 + $0x40] sm:$0xff]
      %v366 = vld [vmem:[#allocation2 + $0x48] sm:$0xff]
      %v367 = vld [vmem:[#allocation2 + $0x50] sm:$0xff]
      %v368 = vld [vmem:[#allocation2 + $0x58] sm:$0xff]
      %v369 = vld [vmem:[#allocation2 + $0x60] sm:$0xff]
      %v370 = vld [vmem:[#allocation2 + $0x68] sm:$0xff]
      %v371 = vld [vmem:[#allocation2 + $0x70] sm:$0xff]
      %v372 = vld [vmem:[#allocation2 + $0x78] sm:$0xff]
      %v373 = vld [vmem:[#allocation2 + $0x80] sm:$0xff]
      %v374 = vld [vmem:[#allocation2 + $0x88] sm:$0xff]
      %v375 = vld [vmem:[#allocation2 + $0x90] sm:$0xff]
      %v376 = vld [vmem:[#allocation2 + $0x98] sm:$0xff]
      %v377 = vld [vmem:[#allocation2 + $0xa0] sm:$0xff]
      %v378 = vld [vmem:[#allocation2 + $0xa8] sm:$0xff]
      %v379 = vld [vmem:[#allocation2 + $0xb0] sm:$0xff]
      %v380 = vld [vmem:[#allocation2 + $0xb8] sm:$0xff]
      %v381 = vld [vmem:[#allocation2 + $0xc0] sm:$0xff]
      %v382 = vld [vmem:[#allocation2 + $0xc8] sm:$0xff]
      %v383 = vld [vmem:[#allocation2 + $0xd0] sm:$0xff]
      %v384 = vld [vmem:[#allocation2 + $0xd8] sm:$0xff]
      %v385 = vld [vmem:[#allocation2 + $0xe0] sm:$0xff]
      %v386 = vld [vmem:[#allocation2 + $0xe8] sm:$0xff]
      %v387 = vld [vmem:[#allocation2 + $0xf0] sm:$0xff]
      %v388 = vld [vmem:[#allocation2 + $0xf8] sm:$0xff]
      %389 = vst [vmem:[#allocation8] sm:$0xff] %v357
      %390 = vst [vmem:[#allocation8 + $0x8] sm:$0xff] %v358
      %391 = vst [vmem:[#allocation8 + $0x10] sm:$0xff] %v359
      %392 = vst [vmem:[#allocation8 + $0x18] sm:$0xff] %v360
      %393 = vst [vmem:[#allocation8 + $0x20] sm:$0xff] %v361
      %394 = vst [vmem:[#allocation8 + $0x28] sm:$0xff] %v362
      %395 = vst [vmem:[#allocation8 + $0x30] sm:$0xff] %v363
      %396 = vst [vmem:[#allocation8 + $0x38] sm:$0xff] %v364
      %397 = vst [vmem:[#allocation8 + $0x40] sm:$0xff] %v365
      %398 = vst [vmem:[#allocation8 + $0x48] sm:$0xff] %v366
      %399 = vst [vmem:[#allocation8 + $0x50] sm:$0xff] %v367
      %400 = vst [vmem:[#allocation8 + $0x58] sm:$0xff] %v368
      %401 = vst [vmem:[#allocation8 + $0x60] sm:$0xff] %v369
      %402 = vst [vmem:[#allocation8 + $0x68] sm:$0xff] %v370
      %403 = vst [vmem:[#allocation8 + $0x70] sm:$0xff] %v371
      %404 = vst [vmem:[#allocation8 + $0x78] sm:$0xff] %v372
      %405 = vst [vmem:[#allocation8 + $0x80] sm:$0xff] %v373
      %406 = vst [vmem:[#allocation8 + $0x88] sm:$0xff] %v374
      %407 = vst [vmem:[#allocation8 + $0x90] sm:$0xff] %v375
      %408 = vst [vmem:[#allocation8 + $0x98] sm:$0xff] %v376
      %409 = vst [vmem:[#allocation8 + $0xa0] sm:$0xff] %v377
      %410 = vst [vmem:[#allocation8 + $0xa8] sm:$0xff] %v378
      %411 = vst [vmem:[#allocation8 + $0xb0] sm:$0xff] %v379
      %412 = vst [vmem:[#allocation8 + $0xb8] sm:$0xff] %v380
      %413 = vst [vmem:[#allocation8 + $0xc0] sm:$0xff] %v381
      %414 = vst [vmem:[#allocation8 + $0xc8] sm:$0xff] %v382
      %415 = vst [vmem:[#allocation8 + $0xd0] sm:$0xff] %v383
      %416 = vst [vmem:[#allocation8 + $0xd8] sm:$0xff] %v384
      %417 = vst [vmem:[#allocation8 + $0xe0] sm:$0xff] %v385
      %418 = vst [vmem:[#allocation8 + $0xe8] sm:$0xff] %v386
      %419 = vst [vmem:[#allocation8 + $0xf0] sm:$0xff] %v387
      %420 = vst [vmem:[#allocation8 + $0xf8] sm:$0xff] %v388
    $region25: #{tpu_custom_call.1} parent=1 // pred_fallthru
      _
    // Predicated region
    $region26: #{tpu_custom_call.1} parent=1 // pred_check
      _
    $region27: #{tpu_custom_call.1} parent=1 // pred_check_branch
      %422 = sbr.rel (0) target = $region29
    $region28: #{tpu_custom_call.1} parent=1 // pred_region
      %424 = vsyncadd [#allocation5], 0
      %s425 = sshll.u32 [#allocation8], 4
      %s426 = int_to_ptr.vmem [resolvable:$true] %s425
      %s427 = sshll.u32 %s2, 4
      %s428 = int_to_ptr.hbm [resolvable:$true] %s427
      %433 = dma.vmem_to_hbm [thread:$0]  %s426, 4096, %s428, [#allocation5], 256, 256, 16
    $region29: #{tpu_custom_call.1} parent=1 // pred_fallthru
      _
    // Predicated region
    $region30: #{tpu_custom_call.1} parent=1 // pred_check
      _
    $region31: #{tpu_custom_call.1} parent=1 // pred_check_branch
      %435 = sbr.rel (0) target = $region33
    $region32: #{tpu_custom_call.1} parent=1 // pred_region
      %437 = dma.done [#allocation5], 4096
    $region33: #{tpu_custom_call.1} parent=1 // pred_fallthru
      _
    %438 = vsyncpa [#allocation4], 1
    %439 = vsyncpa [#allocation7], 1
    %440 = vsyncpa [#allocation5], 1

</llo_original>
